<compile_context>
chip_gen: v7x
topology: tpu7x:2x2x1
jax: 0.10.0
libtpu: 0.0.40
codegen_flags: <defaults>
</compile_context>

<pallas_src>
import jax
import jax.numpy as jnp
from jax.experimental import pallas as pl
from jax.experimental.pallas import tpu as pltpu

_LANE = 128


def _poly_scale_kernel(scale_ref, x_ref, o_ref):
    # scale_ref: (1,) float32 in SMEM (prod(weights ** powers), precomputed).
    # x_ref / o_ref: (tile_rows, 128) VMEM tiles in the input dtype.
    o_ref[...] = (x_ref[...] * scale_ref[0]).astype(o_ref.dtype)


def poly_model_forward(x, weights, powers, *, tile_rows=2048):
    """PolyModel forward: out = x * prod(weights ** powers).

    x: any shape/dtype (NCHW [B, C, H, W] in the reference module).
    weights, powers: [2] float32 module parameters.
    """
    orig_shape = x.shape
    orig_dtype = x.dtype
    n = x.size

    # Scalar parameter product, computed once on the host graph (f32 params,
    # matching the PyTorch module), passed to the kernel through SMEM.
    scale = jnp.prod(weights.astype(jnp.float32) ** powers.astype(jnp.float32))
    scale = jnp.reshape(scale, (1,))

    # Lane-dense [rows, 128] view of x. For the common NCHW case
    # (n % 128 == 0) this is a pure reshape -- no extra HBM pass over x.
    x_flat = jnp.reshape(x, (-1,))
    pad = (-n) % _LANE
    if pad:
        # Rare fallback (only if the element count is not lane-divisible).
        x_flat = jnp.concatenate([x_flat, jnp.zeros((pad,), orig_dtype)])
    rows = x_flat.size // _LANE
    x2d = jnp.reshape(x_flat, (rows, _LANE))

    # Large tiles (2048 x 128 f32 = 1 MiB) keep the kernel at HBM roofline;
    # double-buffered in + out tiles total ~4 MiB, safe under the scoped VMEM
    # default on v5e / v6e / v7x. Small inputs just use one full-array tile.
    tr = min(tile_rows, rows)
    grid = (pl.cdiv(rows, tr),)  # partial last block handled by Pallas

    out2d = pl.pallas_call(
        _poly_scale_kernel,
        out_shape=jax.ShapeDtypeStruct((rows, _LANE), orig_dtype),
        grid_spec=pltpu.PrefetchScalarGridSpec(
            num_scalar_prefetch=0,
            grid=grid,
            in_specs=[
                pl.BlockSpec(memory_space=pltpu.MemorySpace.SMEM),  # scale
                pl.BlockSpec((tr, _LANE), lambda i: (i, 0)),        # x tile
            ],
            out_specs=pl.BlockSpec((tr, _LANE), lambda i: (i, 0)),
        ),
        # Donate x's HBM buffer as the output (in-place streaming scale).
        input_output_aliases={1: 0},
        compiler_params=pltpu.CompilerParams(
            dimension_semantics=("parallel",),
        ),
    )(scale, x2d)

    out_flat = jnp.reshape(out2d, (-1,))
    if pad:
        out_flat = out_flat[:n]
    return jnp.reshape(out_flat, orig_shape)


if __name__ == "__main__":
    key = jax.random.PRNGKey(0)

    # Deterministic parameters matching the module's __init__.
    weights = jnp.array([1.0, 0.3], dtype=jnp.float32)
    powers = jnp.array([2.0, 3.0], dtype=jnp.float32)  # constructor arg `powers`

    # Small NCHW input.
    x = jax.random.normal(key, (2, 4, 16, 16), dtype=jnp.float32)

    # Pure-JAX reference (computed before the kernel runs).
    ref = x * jnp.prod(weights ** powers)

    out = poly_model_forward(x, weights, powers)
    out = jax.block_until_ready(out)

    assert out.shape == x.shape and out.dtype == x.dtype
    assert jnp.allclose(out, ref, rtol=1e-6, atol=1e-6), "mismatch vs reference"

    print("KERNEL_OK")
</pallas_src>

<mosaic_0001>
module attributes {stable_mosaic.version = 11 : i64} {
  func.func @_poly_scale_kernel(%arg0: i32, %arg1: memref<1xf32, #tpu.memory_space<smem>>, %arg2: memref<16x128xf32, #tpu.memory_space<vmem>>, %arg3: memref<16x128xf32, #tpu.memory_space<vmem>>) attributes {dimension_semantics = [#tpu.dimension_semantics<parallel>], iteration_bounds = array<i64: 1>, scalar_prefetch = 0 : i64, scratch_operands = 0 : i64, tpu.core_type = #tpu.core_type<tc>, window_params = [{transform_indices = @transform_0, window_bounds = array<i64: 1>}, {transform_indices = @transform_1, window_bounds = array<i64: 16, 128>}, {transform_indices = @transform_2, window_bounds = array<i64: 16, 128>}]} {
    %c0 = arith.constant 0 : index
    %c0_0 = arith.constant 0 : index
    %0 = vector.load %arg2[%c0, %c0_0] : memref<16x128xf32, #tpu.memory_space<vmem>>, vector<16x128xf32>
    %c0_1 = arith.constant 0 : index
    %1 = memref.load %arg1[%c0_1] : memref<1xf32, #tpu.memory_space<smem>>
    %2 = vector.broadcast %1 : f32 to vector<16x128xf32>
    %3 = arith.mulf %0, %2 : vector<16x128xf32>
    %c0_2 = arith.constant 0 : index
    %c0_3 = arith.constant 0 : index
    %4 = vector.load %arg3[%c0_2, %c0_3] : memref<16x128xf32, #tpu.memory_space<vmem>>, vector<16x128xf32>
    tpu.vector_store %arg3[%c0_2, %c0_3], %3 {strides = array<i32>} : memref<16x128xf32, #tpu.memory_space<vmem>>, vector<16x128xf32>,
    return
  }
  func.func @transform_0(%arg0: i32) -> i32 {
    %c0_i32 = arith.constant 0 : i32
    %c0_i32_0 = arith.constant 0 : i32
    return %c0_i32 : i32
  }
  func.func @transform_1(%arg0: i32) -> (i32, i32) {
    %c0_i32 = arith.constant 0 : i32
    %c0_i32_0 = arith.constant 0 : i32
    return %arg0, %c0_i32 : i32, i32
  }
  func.func @transform_2(%arg0: i32) -> (i32, i32) {
    %c0_i32 = arith.constant 0 : i32
    %c0_i32_0 = arith.constant 0 : i32
    return %arg0, %c0_i32 : i32, i32
  }
}

</mosaic_0001>

<llo_original>
// kernel: tpu_custom_call.1
$region0: #{tpu_custom_call.1}
  #allocation0 [shape = 'u32[]', space=smem, size = 0x4, offset = 0x4, fixed_abs, tag = 'smem constant byte address 0x4 - core index']
  #allocation1 [shape = 'u32[144,128]{1,0:T(1,128)}', space=vmem, size = 0x12000, scoped, tag = 'internal scratch']
  #allocation2 [shape = 'f32[1]{0:T(128)S(6)}', space=smem, size = 0x200, scoped, tag = 'scoped memory for tpu_custom_call.1']
  %s0 = inlined_call_operand.<no memory space> [shape: f32[1], index: 0, kind: input, shape index: {}]
  %s1 = inlined_call_operand.hbm [shape: f32[16,128], index: 1, kind: input, shape index: {}, may-alias: {1,2}]
  %s2 = inlined_call_operand.hbm [shape: f32[16,128], index: 2, kind: output, shape index: {}, may-alias: {1,2}]
  %s3 = sld [smem:[#allocation0]]
  $region22: #{tpu_custom_call.1} parent=0
    _
  %s5 = ssub.s32 1, %s3
  %s6 = scalar_select 0, %s5, %s3
  %7 = sst [smem:[#allocation2]] %s0
  $region1: #{tpu_custom_call.1} parent=0
    #allocation3 [shape = 'u8[8192]{0}', space=vmem, size = 0x2000, scoped, tag = 'input window, operand 1, single buffered']
    #allocation4 [shape = 's32[1]{0}', space=sflag, size = 0x4, scoped, tag = 'scoped memory for tpu_custom_call.1']
    #allocation5 [shape = 's32[1]{0}', space=sflag, size = 0x4, scoped, tag = 'scoped memory for tpu_custom_call.1']
    #allocation6 [shape = 'u8[8192]{0}', space=vmem, size = 0x2000, scoped, tag = 'output window, operand 0, single buffered']
    %8 = vsyncpa [#allocation4], 0
    %9 = vsyncpa [#allocation5], 0
    // Predicated region
    $region2: #{tpu_custom_call.1} parent=1 // pred_check
      _
    $region3: #{tpu_custom_call.1} parent=1 // pred_check_branch
      %11 = sbr.rel (0) target = $region5
    $region4: #{tpu_custom_call.1} parent=1 // pred_region
      _
    $region5: #{tpu_custom_call.1} parent=1 // pred_fallthru
      _
    // Predicated region
    $region6: #{tpu_custom_call.1} parent=1 // pred_check
      _
    $region7: #{tpu_custom_call.1} parent=1 // pred_check_branch
      %13 = sbr.rel (0) target = $region9
    $region8: #{tpu_custom_call.1} parent=1 // pred_region
      %s15 = ssub.s32 256, 256
      %16 = vsyncadd [#allocation4], %s15
      %s17 = sshll.u32 [#allocation3], 4
      %s18 = int_to_ptr.vmem [resolvable:$true] %s17
      %23 = dma.hbm_to_vmem [thread:$0]  %s1, 256, %s18, [#allocation4], 128, 128, 8
    $region9: #{tpu_custom_call.1} parent=1 // pred_fallthru
      _
    // Predicated region
    $region10: #{tpu_custom_call.1} parent=1 // pred_check
      _
    $region11: #{tpu_custom_call.1} parent=1 // pred_check_branch
      %25 = sbr.rel (0) target = $region13
    $region12: #{tpu_custom_call.1} parent=1 // pred_region
      %26 = dma.done [#allocation4], 256
    $region13: #{tpu_custom_call.1} parent=1 // pred_fallthru
      _
    %v27 = vld [vmem:[#allocation3] sm:$0xff]
    %v28 = vld [vmem:[#allocation3 + $0x8] sm:$0xff]
    %s29 = sld [smem:[#allocation2]]
    %v30 = vstv %s29
    %v31 = vmul.f32 %v27, %v30
    %v32 = vmul.f32 %v28, %v30
    %33 = vst [vmem:[#allocation6] sm:$0xff] %v31
    %34 = vst [vmem:[#allocation6 + $0x8] sm:$0xff] %v32
    // Predicated region
    $region14: #{tpu_custom_call.1} parent=1 // pred_check
      _
    $region15: #{tpu_custom_call.1} parent=1 // pred_check_branch
      %36 = sbr.rel (0) target = $region17
    $region16: #{tpu_custom_call.1} parent=1 // pred_region
      %s38 = ssub.s32 256, 256
      %39 = vsyncadd [#allocation5], %s38
      %s40 = sshll.u32 [#allocation6], 4
      %s41 = int_to_ptr.vmem [resolvable:$true] %s40
      %46 = dma.vmem_to_hbm [thread:$0]  %s41, 256, %s2, [#allocation5], 128, 128, 8
    $region17: #{tpu_custom_call.1} parent=1 // pred_fallthru
      _
    // Predicated region
    $region18: #{tpu_custom_call.1} parent=1 // pred_check
      _
    $region19: #{tpu_custom_call.1} parent=1 // pred_check_branch
      %48 = sbr.rel (0) target = $region21
    $region20: #{tpu_custom_call.1} parent=1 // pred_region
      %49 = dma.done [#allocation5], 256
    $region21: #{tpu_custom_call.1} parent=1 // pred_fallthru
      _
    %50 = vsyncpa [#allocation4], 1
    %51 = vsyncpa [#allocation5], 1

</llo_original>
